<compile_context>
chip_gen: v7x
topology: tpu7x:2x2x1
jax: 0.10.0
libtpu: 0.0.40
codegen_flags: <defaults>
</compile_context>

<pallas_src>
import functools
import math

import jax
import jax.numpy as jnp
from jax.experimental import pallas as pl
from jax.experimental.pallas import tpu as pltpu


def _round_up(x, m):
    return ((x + m - 1) // m) * m


def _vmem_limit_bytes(request):
    """Clamp a VMEM request to ~70% of per-core VMEM capacity."""
    cap = 64 << 20
    try:
        cap = int(getattr(pltpu.get_tpu_info(), "vmem_capacity_bytes", cap))
    except Exception:
        pass
    return int(min(max(int(request), 4 << 20), int(cap * 0.7)))


# ---------------------------------------------------------------------------
# Fused fast path: out = maybe_relu(adj @ (inp @ W + b)), everything resident.
# ---------------------------------------------------------------------------
def _fused_gcn_kernel(inp_ref, adj_ref, w_ref, b_ref, out_ref, *, is_relu):
    h = jnp.dot(inp_ref[...], w_ref[...], preferred_element_type=jnp.float32)
    h = (h + b_ref[...]).astype(inp_ref.dtype)     # feed MXU in compute dtype
    out = jnp.dot(adj_ref[...], h, preferred_element_type=jnp.float32)
    if is_relu:
        out = jnp.maximum(out, 0.0)
    out_ref[...] = out.astype(out_ref.dtype)


# ---------------------------------------------------------------------------
# Kernel 1: h = inp @ W + b   (tiled over rows i and output columns j)
# ---------------------------------------------------------------------------
def _linear_bias_kernel(inp_ref, w_ref, b_ref, h_ref):
    acc = jnp.dot(inp_ref[...], w_ref[...], preferred_element_type=jnp.float32)
    h_ref[...] = (acc + b_ref[...]).astype(h_ref.dtype)


# ---------------------------------------------------------------------------
# Kernel 2: out = maybe_relu(adj @ h)
#   grid = (rows i [parallel], reduction k [arbitrary]); f32 VMEM accumulator.
# ---------------------------------------------------------------------------
def _adj_matmul_resident_kernel(adj_ref, h_ref, out_ref, acc_ref, *,
                                is_relu, tk):
    # h_ref holds the full (Np, Hp) h, fetched once (constant block index).
    k = pl.program_id(1)

    @pl.when(k == 0)
    def _():
        acc_ref[...] = jnp.zeros_like(acc_ref)

    off = pl.multiple_of(k * tk, tk)
    acc_ref[...] += jnp.dot(adj_ref[...], h_ref[pl.ds(off, tk), :],
                            preferred_element_type=jnp.float32)

    @pl.when(k == pl.num_programs(1) - 1)
    def _():
        acc = acc_ref[...]
        if is_relu:
            acc = jnp.maximum(acc, 0.0)
        out_ref[...] = acc.astype(out_ref.dtype)


def _adj_matmul_streamed_kernel(adj_ref, h_ref, out_ref, acc_ref, *, is_relu):
    # h_ref is a (tk, Hp) block streamed per reduction step.
    k = pl.program_id(1)

    @pl.when(k == 0)
    def _():
        acc_ref[...] = jnp.zeros_like(acc_ref)

    acc_ref[...] += jnp.dot(adj_ref[...], h_ref[...],
                            preferred_element_type=jnp.float32)

    @pl.when(k == pl.num_programs(1) - 1)
    def _():
        acc = acc_ref[...]
        if is_relu:
            acc = jnp.maximum(acc, 0.0)
        out_ref[...] = acc.astype(out_ref.dtype)


def gcn_forward(inp, adj, W, b, is_relu=True, *,
                tile_n=256, compute_dtype=jnp.bfloat16,
                force_two_stage=False, h_resident=None):
    """GCN forward: maybe_relu(adj @ (inp @ W + b)).

    inp: [N, H], adj: [N, N], W: [H, H], b: [H].  Returns float32 [N, H].
    compute_dtype: MXU operand dtype (default bf16; accumulation is f32, so
    results match the f32 reference to ~1e-3 relative).
    """
    N, H = inp.shape
    assert adj.shape == (N, N) and W.shape == (H, H) and b.shape == (H,)
    out_dtype = jnp.float32
    cdt = jnp.dtype(compute_dtype)
    elt = cdt.itemsize

    # ---- lane-dense padded shapes (multiples of 128; zero fill is exact) ---
    Hp = _round_up(H, 128)
    t = max(128, _round_up(min(tile_n, _round_up(N, 128)), 128))
    Np = _round_up(N, t)

    def pad2(x, r, c, dt):
        xr, xc = x.shape
        if xr != r or xc != c:
            x = jnp.pad(x, ((0, r - xr), (0, c - xc)))
        return x.astype(dt)

    inp_p = pad2(inp, Np, Hp, cdt)
    adj_p = pad2(adj, Np, Np, cdt)
    W_p = pad2(W, Hp, Hp, cdt)
    b_p = jnp.pad(b, (0, Hp - H)).astype(jnp.float32).reshape(1, Hp)

    # ---- fused single-kernel fast path for small problems ------------------
    fused_bytes = (elt * (Np * Hp + Np * Np + Hp * Hp)   # inp, adj, W
                   + 4 * Hp                              # b (f32)
                   + 4 * Np * Hp                         # out (f32)
                   + 8 * Np * Hp)                        # f32 intermediates
    if (not force_two_stage) and fused_bytes <= (10 << 20):
        out_p = pl.pallas_call(
            functools.partial(_fused_gcn_kernel, is_relu=bool(is_relu)),
            out_shape=jax.ShapeDtypeStruct((Np, Hp), out_dtype),
            grid=(1,),
            in_specs=[
                pl.BlockSpec((Np, Hp), lambda i: (0, 0)),
                pl.BlockSpec((Np, Np), lambda i: (0, 0)),
                pl.BlockSpec((Hp, Hp), lambda i: (0, 0)),
                pl.BlockSpec((1, Hp), lambda i: (0, 0)),
            ],
            out_specs=pl.BlockSpec((Np, Hp), lambda i: (0, 0)),
            compiler_params=pltpu.CompilerParams(
                dimension_semantics=("arbitrary",),
                vmem_limit_bytes=_vmem_limit_bytes(2 * fused_bytes + (4 << 20))),
            cost_estimate=pl.CostEstimate(
                flops=2 * Np * Hp * Hp + 2 * Np * Np * Hp,
                transcendentals=0,
                bytes_accessed=elt * (Np * Hp + Np * Np + Hp * Hp)
                + 4 * (Hp + Np * Hp)),
        )(inp_p, adj_p, W_p, b_p)
        if Np != N or Hp != H:
            out_p = out_p[:N, :H]
        return out_p

    # ---- stage 1: h = inp @ W + b ------------------------------------------
    # Tile W's output columns so the weight block never becomes a full HxH
    # double-buffered slab for large H.
    tj = 512 if Hp % 512 == 0 else (256 if Hp % 256 == 0 else 128)

    h = pl.pallas_call(
        _linear_bias_kernel,
        out_shape=jax.ShapeDtypeStruct((Np, Hp), cdt),
        grid_spec=pltpu.PrefetchScalarGridSpec(
            num_scalar_prefetch=0,
            grid=(Np // t, Hp // tj),
            in_specs=[
                pl.BlockSpec((t, Hp), lambda i, j: (i, 0)),
                pl.BlockSpec((Hp, tj), lambda i, j: (0, j)),
                pl.BlockSpec((1, tj), lambda i, j: (0, j)),
            ],
            out_specs=pl.BlockSpec((t, tj), lambda i, j: (i, j)),
        ),
        compiler_params=pltpu.CompilerParams(
            dimension_semantics=("parallel", "parallel"),
            vmem_limit_bytes=_vmem_limit_bytes(
                2 * elt * (t * Hp + Hp * tj + t * tj) + (4 << 20))),
        cost_estimate=pl.CostEstimate(
            flops=2 * Np * Hp * Hp,
            transcendentals=0,
            bytes_accessed=elt * (2 * Np * Hp + Hp * Hp) + 4 * Hp),
    )(inp_p, W_p, b_p)

    # ---- stage 2: out = maybe_relu(adj @ h) --------------------------------
    tk = t                      # 256-deep contraction fills v6e/v7x MXUs
    h_bytes = elt * Np * Hp

    resident = h_resident
    if resident is None:
        # Keep full h VMEM-resident when even a (conservatively assumed)
        # double-buffered copy fits comfortably.
        resident = (2 * h_bytes) <= (16 << 20)

    if resident:
        kernel2 = functools.partial(_adj_matmul_resident_kernel,
                                    is_relu=bool(is_relu), tk=tk)
        h_spec = pl.BlockSpec((Np, Hp), lambda i, k: (0, 0))
        h_traffic = h_bytes                       # fetched once, reused
        vmem2 = (2 * elt * t * tk                 # adj tiles
                 + 2 * h_bytes                    # resident h
                 + 2 * 4 * t * Hp                 # out tiles
                 + 4 * t * Hp                     # accumulator scratch
                 + (2 << 20))
    else:
        kernel2 = functools.partial(_adj_matmul_streamed_kernel,
                                    is_relu=bool(is_relu))
        h_spec = pl.BlockSpec((tk, Hp), lambda i, k: (k, 0))
        h_traffic = (Np // t) * Np * Hp * elt     # h re-read per row tile
        vmem2 = (2 * elt * (t * tk + tk * Hp)
                 + 2 * 4 * t * Hp
                 + 4 * t * Hp
                 + (2 << 20))

    out_p = pl.pallas_call(
        kernel2,
        out_shape=jax.ShapeDtypeStruct((Np, Hp), out_dtype),
        grid_spec=pltpu.PrefetchScalarGridSpec(
            num_scalar_prefetch=0,
            grid=(Np // t, Np // tk),
            in_specs=[
                pl.BlockSpec((t, tk), lambda i, k: (i, k)),
                h_spec,
            ],
            out_specs=pl.BlockSpec((t, Hp), lambda i, k: (i, 0)),
            scratch_shapes=[pltpu.VMEM((t, Hp), jnp.float32)],
        ),
        compiler_params=pltpu.CompilerParams(
            dimension_semantics=("parallel", "arbitrary"),
            vmem_limit_bytes=_vmem_limit_bytes(vmem2)),
        cost_estimate=pl.CostEstimate(
            flops=2 * Np * Np * Hp,
            transcendentals=0,
            bytes_accessed=elt * Np * Np + h_traffic + 4 * Np * Hp),
    )(adj_p, h)

    if Np != N or Hp != H:
        out_p = out_p[:N, :H]
    return out_p


def _gcn_ref(inp, adj, W, b, is_relu=True):
    h = jnp.dot(inp, W, precision=jax.lax.Precision.HIGHEST) + b
    out = jnp.dot(adj, h, precision=jax.lax.Precision.HIGHEST)
    return jnp.maximum(out, 0.0) if is_relu else out


if __name__ == "__main__":
    key = jax.random.PRNGKey(0)

    def make_inputs(key, num_nodes, hid_size):
        k_w, k_b, k_inp, k_adj = jax.random.split(key, 4)
        stdv = 1.0 / math.sqrt(hid_size // 2)
        W = jax.random.uniform(k_w, (hid_size, hid_size), jnp.float32,
                               minval=-stdv, maxval=stdv)
        b = jax.random.uniform(k_b, (hid_size,), jnp.float32,
                               minval=-stdv, maxval=stdv)
        inp = jax.random.normal(k_inp, (num_nodes, hid_size), jnp.float32)
        adj = jax.random.uniform(k_adj, (num_nodes, num_nodes), jnp.float32)
        return inp, adj, W, b

    def check(out, ref, tol):
        err = float(jnp.max(jnp.abs(out - ref)))
        scale = float(jnp.max(jnp.abs(ref))) + 1e-6
        assert err <= tol * scale, f"max err {err} vs scale {scale}"

    k0, k1, k2 = jax.random.split(key, 3)

    # 1) Module default hid_size=256, 256 nodes: fused fast path, bf16 MXU
    #    operands + f32 accumulation (relaxed tolerance for the bf16 casts).
    inp, adj, W, b = make_inputs(k0, 256, 256)
    out = jax.block_until_ready(gcn_forward(inp, adj, W, b, is_relu=True))
    ref = _gcn_ref(inp, adj, W, b, is_relu=True)
    assert out.shape == (256, 256) and out.dtype == jnp.float32
    check(out, ref, 2e-2)

    # 2) Ragged shapes + is_relu=False + exact f32 compute path (padding to
    #    lane-dense 128 multiples, then sliced back).
    inp2, adj2, W2, b2 = make_inputs(k1, 50, 96)
    out2 = jax.block_until_ready(
        gcn_forward(inp2, adj2, W2, b2, is_relu=False,
                    compute_dtype=jnp.float32))
    ref2 = _gcn_ref(inp2, adj2, W2, b2, is_relu=False)
    assert out2.shape == (50, 96)
    check(out2, ref2, 5e-3)

    # 3) Two-stage tiled path with VMEM-resident h (forced, to exercise the
    #    large-N code on small shapes).
    inp3, adj3, W3, b3 = make_inputs(k2, 384, 256)
    out3 = jax.block_until_ready(
        gcn_forward(inp3, adj3, W3, b3, is_relu=True, force_two_stage=True))
    ref3 = _gcn_ref(inp3, adj3, W3, b3, is_relu=True)
    assert out3.shape == (384, 256)
    check(out3, ref3, 2e-2)

    # 4) Two-stage tiled path with streamed (non-resident) h blocks.
    out4 = jax.block_until_ready(
        gcn_forward(inp3, adj3, W3, b3, is_relu=True, force_two_stage=True,
                    h_resident=False))
    check(out4, ref3, 2e-2)

    # TODO(synk): adj sparsity skipping (PrefetchScalarGridSpec nonzero-block
    # list) not implemented — dense adjacency assumed, matching the module.
    print("KERNEL_OK")
</pallas_src>

<mosaic_0001>
module attributes {stable_mosaic.version = 11 : i64} {
  func.func @_fused_gcn_kernel(%arg0: i32, %arg1: memref<256x256xbf16, #tpu.memory_space<vmem>>, %arg2: memref<256x256xbf16, #tpu.memory_space<vmem>>, %arg3: memref<256x256xbf16, #tpu.memory_space<vmem>>, %arg4: memref<1x256xf32, #tpu.memory_space<vmem>>, %arg5: memref<256x256xf32, #tpu.memory_space<vmem>>) attributes {dimension_semantics = [#tpu.dimension_semantics<arbitrary>], iteration_bounds = array<i64: 1>, scalar_prefetch = 0 : i64, scratch_operands = 0 : i64, tpu.core_type = #tpu.core_type<tc>, window_params = [{pipeline_mode = #tpu.pipeline_mode<synchronous>, transform_indices = @transform_0, window_bounds = array<i64: 256, 256>}, {pipeline_mode = #tpu.pipeline_mode<synchronous>, transform_indices = @transform_1, window_bounds = array<i64: 256, 256>}, {pipeline_mode = #tpu.pipeline_mode<synchronous>, transform_indices = @transform_2, window_bounds = array<i64: 256, 256>}, {pipeline_mode = #tpu.pipeline_mode<synchronous>, transform_indices = @transform_3, window_bounds = array<i64: 1, 256>}, {pipeline_mode = #tpu.pipeline_mode<synchronous>, transform_indices = @transform_4, window_bounds = array<i64: 256, 256>}]} {
    %c0 = arith.constant 0 : index
    %c0_0 = arith.constant 0 : index
    %0 = vector.load %arg1[%c0, %c0_0] : memref<256x256xbf16, #tpu.memory_space<vmem>>, vector<256x256xbf16>
    %c0_1 = arith.constant 0 : index
    %c0_2 = arith.constant 0 : index
    %1 = vector.load %arg3[%c0_1, %c0_2] : memref<256x256xbf16, #tpu.memory_space<vmem>>, vector<256x256xbf16>
    %cst = arith.constant dense<0.000000e+00> : vector<256x256xf32>
    %2 = tpu.matmul %0, %1, %cst {dimension_numbers = #tpu.dot_dimension_numbers<[1], [0], [0], [1], [0, 0, 1, 1], [], []>} : vector<256x256xbf16>, vector<256x256xbf16>, vector<256x256xf32> -> vector<256x256xf32>
    %c0_3 = arith.constant 0 : index
    %c0_4 = arith.constant 0 : index
    %3 = vector.load %arg4[%c0_3, %c0_4] : memref<1x256xf32, #tpu.memory_space<vmem>>, vector<1x256xf32>
    %4 = vector.broadcast %3 : vector<1x256xf32> to vector<256x256xf32>
    %5 = arith.addf %2, %4 : vector<256x256xf32>
    %6 = arith.truncf %5 : vector<256x256xf32> to vector<256x256xbf16>
    %c0_5 = arith.constant 0 : index
    %c0_6 = arith.constant 0 : index
    %7 = vector.load %arg2[%c0_5, %c0_6] : memref<256x256xbf16, #tpu.memory_space<vmem>>, vector<256x256xbf16>
    %cst_7 = arith.constant dense<0.000000e+00> : vector<256x256xf32>
    %8 = tpu.matmul %7, %6, %cst_7 {dimension_numbers = #tpu.dot_dimension_numbers<[1], [0], [0], [1], [0, 0, 1, 1], [], []>} : vector<256x256xbf16>, vector<256x256xbf16>, vector<256x256xf32> -> vector<256x256xf32>
    %cst_8 = arith.constant 0.000000e+00 : f32
    %9 = vector.broadcast %cst_8 : f32 to vector<256x256xf32>
    %10 = arith.maximumf %8, %9 : vector<256x256xf32>
    %c0_9 = arith.constant 0 : index
    %c0_10 = arith.constant 0 : index
    %11 = vector.load %arg5[%c0_9, %c0_10] : memref<256x256xf32, #tpu.memory_space<vmem>>, vector<256x256xf32>
    tpu.vector_store %arg5[%c0_9, %c0_10], %10 {strides = array<i32>} : memref<256x256xf32, #tpu.memory_space<vmem>>, vector<256x256xf32>,
    return
  }
  func.func @transform_0(%arg0: i32) -> (i32, i32) {
    %c0_i32 = arith.constant 0 : i32
    %c0_i32_0 = arith.constant 0 : i32
    %c0_i32_1 = arith.constant 0 : i32
    return %c0_i32, %c0_i32_0 : i32, i32
  }
  func.func @transform_1(%arg0: i32) -> (i32, i32) {
    %c0_i32 = arith.constant 0 : i32
    %c0_i32_0 = arith.constant 0 : i32
    %c0_i32_1 = arith.constant 0 : i32
    return %c0_i32, %c0_i32_0 : i32, i32
  }
  func.func @transform_2(%arg0: i32) -> (i32, i32) {
    %c0_i32 = arith.constant 0 : i32
    %c0_i32_0 = arith.constant 0 : i32
    %c0_i32_1 = arith.constant 0 : i32
    return %c0_i32, %c0_i32_0 : i32, i32
  }
  func.func @transform_3(%arg0: i32) -> (i32, i32) {
    %c0_i32 = arith.constant 0 : i32
    %c0_i32_0 = arith.constant 0 : i32
    %c0_i32_1 = arith.constant 0 : i32
    return %c0_i32, %c0_i32_0 : i32, i32
  }
  func.func @transform_4(%arg0: i32) -> (i32, i32) {
    %c0_i32 = arith.constant 0 : i32
    %c0_i32_0 = arith.constant 0 : i32
    %c0_i32_1 = arith.constant 0 : i32
    return %c0_i32, %c0_i32_0 : i32, i32
  }
}

</mosaic_0001>

<llo_original>
// kernel: tpu_custom_call.1
$region0: #{tpu_custom_call.1}
  #allocation0 [shape = 'u32[]', space=smem, size = 0x4, offset = 0x4, fixed_abs, tag = 'smem constant byte address 0x4 - core index']
  #allocation1 [shape = 'u32[144,128]{1,0:T(1,128)}', space=vmem, size = 0x12000, scoped, tag = 'internal scratch']
  %s0 = inlined_call_operand.hbm [shape: bf16[256,256], index: 0, kind: input, shape index: {}]
  %s1 = inlined_call_operand.hbm [shape: bf16[256,256], index: 1, kind: input, shape index: {}]
  %s2 = inlined_call_operand.hbm [shape: bf16[256,256], index: 2, kind: input, shape index: {}]
  %s3 = inlined_call_operand.vmem [shape: f32[1,256], index: 3, kind: input, shape index: {}]
  %s4 = inlined_call_operand.hbm [shape: f32[256,256], index: 4, kind: output, shape index: {}]
  %s5 = sld [smem:[#allocation0]]
  $region38: #{tpu_custom_call.1} parent=0
    _
  %s7 = ssub.s32 1, %s5
  %s8 = scalar_select 0, %s7, %s5
  $region1: #{tpu_custom_call.1} parent=0
    #allocation2 [shape = 'u8[131072]{0}', space=vmem, size = 0x20000, scoped, tag = 'input window, operand 0, single buffered']
    #allocation3 [shape = 's32[1]{0}', space=sflag, size = 0x4, scoped, tag = 'scoped memory for tpu_custom_call.1']
    #allocation4 [shape = 's32[1]{0}', space=sflag, size = 0x4, scoped, tag = 'scoped memory for tpu_custom_call.1']
    #allocation5 [shape = 'u8[131072]{0}', space=vmem, size = 0x20000, scoped, tag = 'input window, operand 1, single buffered']
    #allocation6 [shape = 's32[1]{0}', space=sflag, size = 0x4, scoped, tag = 'scoped memory for tpu_custom_call.1']
    #allocation7 [shape = 'u8[131072]{0}', space=vmem, size = 0x20000, scoped, tag = 'input window, operand 2, single buffered']
    #allocation8 [shape = 'u8[262144]{0}', space=vmem, size = 0x40000, scoped, tag = 'output window, operand 0, single buffered']
    %9 = vsyncpa [#allocation3], 0
    %10 = vsyncpa [#allocation6], 0
    %11 = vsyncpa [#allocation4], 0
    // Predicated region
    $region2: #{tpu_custom_call.1} parent=1 // pred_check
      _
    $region3: #{tpu_custom_call.1} parent=1 // pred_check_branch
      %13 = sbr.rel (0) target = $region5
    $region4: #{tpu_custom_call.1} parent=1 // pred_region
      %s15 = ssub.s32 4096, 4096
      %16 = vsyncadd [#allocation3], %s15
      %s17 = sshll.u32 [#allocation2], 4
      %s18 = int_to_ptr.vmem [resolvable:$true] %s17
      %23 = dma.hbm_to_vmem [thread:$0]  %s0, 4096, %s18, [#allocation3], 128, 128, 8
    $region5: #{tpu_custom_call.1} parent=1 // pred_fallthru
      _
    // Predicated region
    $region6: #{tpu_custom_call.1} parent=1 // pred_check
      _
    $region7: #{tpu_custom_call.1} parent=1 // pred_check_branch
      %25 = sbr.rel (0) target = $region9
    $region8: #{tpu_custom_call.1} parent=1 // pred_region
      %s27 = ssub.s32 4096, 4096
      %28 = vsyncadd [#allocation6], %s27
      %s29 = sshll.u32 [#allocation5], 4
      %s30 = int_to_ptr.vmem [resolvable:$true] %s29
      %35 = dma.hbm_to_vmem [thread:$0]  %s1, 4096, %s30, [#allocation6], 128, 128, 8
    $region9: #{tpu_custom_call.1} parent=1 // pred_fallthru
      _
    // Predicated region
    $region10: #{tpu_custom_call.1} parent=1 // pred_check
      _
    $region11: #{tpu_custom_call.1} parent=1 // pred_check_branch
      %37 = sbr.rel (0) target = $region13
    $region12: #{tpu_custom_call.1} parent=1 // pred_region
      %s39 = ssub.s32 4096, 4096
      %40 = vsyncadd [#allocation6], %s39
      %s41 = sshll.u32 [#allocation7], 4
      %s42 = int_to_ptr.vmem [resolvable:$true] %s41
      %47 = dma.hbm_to_vmem [thread:$0]  %s2, 4096, %s42, [#allocation6], 128, 128, 8
    $region13: #{tpu_custom_call.1} parent=1 // pred_fallthru
      _
    // Predicated region
    $region14: #{tpu_custom_call.1} parent=1 // pred_check
      _
    $region15: #{tpu_custom_call.1} parent=1 // pred_check_branch
      %49 = sbr.rel (0) target = $region17
    $region16: #{tpu_custom_call.1} parent=1 // pred_region
      _
    $region17: #{tpu_custom_call.1} parent=1 // pred_fallthru
      _
    // Predicated region
    $region18: #{tpu_custom_call.1} parent=1 // pred_check
      _
    $region19: #{tpu_custom_call.1} parent=1 // pred_check_branch
      %51 = sbr.rel (0) target = $region21
    $region20: #{tpu_custom_call.1} parent=1 // pred_region
      %52 = dma.done [#allocation3], 4096
    $region21: #{tpu_custom_call.1} parent=1 // pred_fallthru
      _
    // Predicated region
    $region22: #{tpu_custom_call.1} parent=1 // pred_check
      _
    $region23: #{tpu_custom_call.1} parent=1 // pred_check_branch
      %54 = sbr.rel (0) target = $region25
    $region24: #{tpu_custom_call.1} parent=1 // pred_region
      %55 = dma.done [#allocation6], 4096
    $region25: #{tpu_custom_call.1} parent=1 // pred_fallthru
      _
    // Predicated region
    $region26: #{tpu_custom_call.1} parent=1 // pred_check
      _
    $region27: #{tpu_custom_call.1} parent=1 // pred_check_branch
      %57 = sbr.rel (0) target = $region29
    $region28: #{tpu_custom_call.1} parent=1 // pred_region
      %58 = dma.done [#allocation6], 4096
    $region29: #{tpu_custom_call.1} parent=1 // pred_fallthru
      _
    %v59 = vld [vmem:[#allocation2] sm:$0xff]
    %v60 = vld [vmem:[#allocation2 + $0x8] sm:$0xff]
    %v61 = vld [vmem:[#allocation2 + $0x10] sm:$0xff]
    %v62 = vld [vmem:[#allocation2 + $0x18] sm:$0xff]
    %v63 = vld [vmem:[#allocation2 + $0x20] sm:$0xff]
    %v64 = vld [vmem:[#allocation2 + $0x28] sm:$0xff]
    %v65 = vld [vmem:[#allocation2 + $0x30] sm:$0xff]
    %v66 = vld [vmem:[#allocation2 + $0x38] sm:$0xff]
    %v67 = vld [vmem:[#allocation2 + $0x40] sm:$0xff]
    %v68 = vld [vmem:[#allocation2 + $0x48] sm:$0xff]
    %v69 = vld [vmem:[#allocation2 + $0x50] sm:$0xff]
    %v70 = vld [vmem:[#allocation2 + $0x58] sm:$0xff]
    %v71 = vld [vmem:[#allocation2 + $0x60] sm:$0xff]
    %v72 = vld [vmem:[#allocation2 + $0x68] sm:$0xff]
    %v73 = vld [vmem:[#allocation2 + $0x70] sm:$0xff]
    %v74 = vld [vmem:[#allocation2 + $0x78] sm:$0xff]
    %v75 = vld [vmem:[#allocation2 + $0x80] sm:$0xff]
    %v76 = vld [vmem:[#allocation2 + $0x88] sm:$0xff]
    %v77 = vld [vmem:[#allocation2 + $0x90] sm:$0xff]
    %v78 = vld [vmem:[#allocation2 + $0x98] sm:$0xff]
    %v79 = vld [vmem:[#allocation2 + $0xa0] sm:$0xff]
    %v80 = vld [vmem:[#allocation2 + $0xa8] sm:$0xff]
    %v81 = vld [vmem:[#allocation2 + $0xb0] sm:$0xff]
    %v82 = vld [vmem:[#allocation2 + $0xb8] sm:$0xff]
    %v83 = vld [vmem:[#allocation2 + $0xc0] sm:$0xff]
    %v84 = vld [vmem:[#allocation2 + $0xc8] sm:$0xff]
    %v85 = vld [vmem:[#allocation2 + $0xd0] sm:$0xff]
    %v86 = vld [vmem:[#allocation2 + $0xd8] sm:$0xff]
    %v87 = vld [vmem:[#allocation2 + $0xe0] sm:$0xff]
    %v88 = vld [vmem:[#allocation2 + $0xe8] sm:$0xff]
    %v89 = vld [vmem:[#allocation2 + $0xf0] sm:$0xff]
    %v90 = vld [vmem:[#allocation2 + $0xf8] sm:$0xff]
    %v91 = vld [vmem:[#allocation7] sm:$0xff]
    %v92 = vld [vmem:[#allocation7 + $0x8] sm:$0xff]
    %v93 = vld [vmem:[#allocation7 + $0x10] sm:$0xff]
    %v94 = vld [vmem:[#allocation7 + $0x18] sm:$0xff]
    %v95 = vld [vmem:[#allocation7 + $0x20] sm:$0xff]
    %v96 = vld [vmem:[#allocation7 + $0x28] sm:$0xff]
    %v97 = vld [vmem:[#allocation7 + $0x30] sm:$0xff]
    %v98 = vld [vmem:[#allocation7 + $0x38] sm:$0xff]
    %v99 = vld [vmem:[#allocation7 + $0x40] sm:$0xff]
    %v100 = vld [vmem:[#allocation7 + $0x48] sm:$0xff]
    %v101 = vld [vmem:[#allocation7 + $0x50] sm:$0xff]
    %v102 = vld [vmem:[#allocation7 + $0x58] sm:$0xff]
    %v103 = vld [vmem:[#allocation7 + $0x60] sm:$0xff]
    %v104 = vld [vmem:[#allocation7 + $0x68] sm:$0xff]
    %v105 = vld [vmem:[#allocation7 + $0x70] sm:$0xff]
    %v106 = vld [vmem:[#allocation7 + $0x78] sm:$0xff]
    %v107 = vld [vmem:[#allocation7 + $0x80] sm:$0xff]
    %v108 = vld [vmem:[#allocation7 + $0x88] sm:$0xff]
    %v109 = vld [vmem:[#allocation7 + $0x90] sm:$0xff]
    %v110 = vld [vmem:[#allocation7 + $0x98] sm:$0xff]
    %v111 = vld [vmem:[#allocation7 + $0xa0] sm:$0xff]
    %v112 = vld [vmem:[#allocation7 + $0xa8] sm:$0xff]
    %v113 = vld [vmem:[#allocation7 + $0xb0] sm:$0xff]
    %v114 = vld [vmem:[#allocation7 + $0xb8] sm:$0xff]
    %v115 = vld [vmem:[#allocation7 + $0xc0] sm:$0xff]
    %v116 = vld [vmem:[#allocation7 + $0xc8] sm:$0xff]
    %v117 = vld [vmem:[#allocation7 + $0xd0] sm:$0xff]
    %v118 = vld [vmem:[#allocation7 + $0xd8] sm:$0xff]
    %v119 = vld [vmem:[#allocation7 + $0xe0] sm:$0xff]
    %v120 = vld [vmem:[#allocation7 + $0xe8] sm:$0xff]
    %v121 = vld [vmem:[#allocation7 + $0xf0] sm:$0xff]
    %v122 = vld [vmem:[#allocation7 + $0xf8] sm:$0xff]
    %v123 = vld [vmem:[%s3] sm:$0x3]
    %v125 = vlaneseq
    %v126 = vshrl.u32 %v125, 7
    %v127 = vsub.s32 0, %v126
    %v128 = vrot.slane %v123, %v127
    %v129 = vlaneseq
    %v130 = vshrl.u32 %v129, 7
    %v131 = vsub.s32 1, %v130
    %v132 = vrot.slane %v123, %v131
    %v167 = vunpack.c.l.b16 %v59
    %v168 = vunpack.c.h.b16 %v59
    %v169 = vunpack.c.l.b16 %v60
    %v170 = vunpack.c.h.b16 %v60
    %v171 = vunpack.c.l.b16 %v61
    %v172 = vunpack.c.h.b16 %v61
    %v173 = vunpack.c.l.b16 %v62
    %v174 = vunpack.c.h.b16 %v62
    %v175 = vunpack.c.l.b16 %v63
    %v176 = vunpack.c.h.b16 %v63
    %v177 = vunpack.c.l.b16 %v64
    %v178 = vunpack.c.h.b16 %v64
    %v179 = vunpack.c.l.b16 %v65
    %v180 = vunpack.c.h.b16 %v65
    %v181 = vunpack.c.l.b16 %v66
    %v182 = vunpack.c.h.b16 %v66
    %v183 = vunpack.c.l.b16 %v67
    %v184 = vunpack.c.h.b16 %v67
    %v185 = vunpack.c.l.b16 %v68
    %v186 = vunpack.c.h.b16 %v68
    %v187 = vunpack.c.l.b16 %v69
    %v188 = vunpack.c.h.b16 %v69
    %v189 = vunpack.c.l.b16 %v70
    %v190 = vunpack.c.h.b16 %v70
    %v191 = vunpack.c.l.b16 %v71
    %v192 = vunpack.c.h.b16 %v71
    %v193 = vunpack.c.l.b16 %v72
    %v194 = vunpack.c.h.b16 %v72
    %v195 = vunpack.c.l.b16 %v73
    %v196 = vunpack.c.h.b16 %v73
    %v197 = vunpack.c.l.b16 %v74
    %v198 = vunpack.c.h.b16 %v74
    %v199 = vunpack.c.l.b16 %v75
    %v200 = vunpack.c.h.b16 %v75
    %v201 = vunpack.c.l.b16 %v76
    %v202 = vunpack.c.h.b16 %v76
    %v203 = vunpack.c.l.b16 %v77
    %v204 = vunpack.c.h.b16 %v77
    %v205 = vunpack.c.l.b16 %v78
    %v206 = vunpack.c.h.b16 %v78
    %v207 = vunpack.c.l.b16 %v79
    %v208 = vunpack.c.h.b16 %v79
    %v209 = vunpack.c.l.b16 %v80
    %v210 = vunpack.c.h.b16 %v80
    %v211 = vunpack.c.l.b16 %v81
    %v212 = vunpack.c.h.b16 %v81
    %v213 = vunpack.c.l.b16 %v82
    %v214 = vunpack.c.h.b16 %v82
    %v215 = vunpack.c.l.b16 %v83
    %v216 = vunpack.c.h.b16 %v83
    %v217 = vunpack.c.l.b16 %v84
    %v218 = vunpack.c.h.b16 %v84
    %v219 = vunpack.c.l.b16 %v85
    %v220 = vunpack.c.h.b16 %v85
    %v221 = vunpack.c.l.b16 %v86
    %v222 = vunpack.c.h.b16 %v86
    %v223 = vunpack.c.l.b16 %v87
    %v224 = vunpack.c.h.b16 %v87
    %v225 = vunpack.c.l.b16 %v88
    %v226 = vunpack.c.h.b16 %v88
    %v227 = vunpack.c.l.b16 %v89
    %v228 = vunpack.c.h.b16 %v89
    %v229 = vunpack.c.l.b16 %v90
    %v230 = vunpack.c.h.b16 %v90
    %v231 = vpack.c.b16 %v169, %v167
    %v232 = vpack.c.b16 %v170, %v168
    %v233 = vpack.c.b16 %v173, %v171
    %v234 = vpack.c.b16 %v174, %v172
    %v235 = vpack.c.b16 %v177, %v175
    %v236 = vpack.c.b16 %v178, %v176
    %v237 = vpack.c.b16 %v181, %v179
    %v238 = vpack.c.b16 %v182, %v180
    %v239 = vpack.c.b16 %v185, %v183
    %v240 = vpack.c.b16 %v186, %v184
    %v241 = vpack.c.b16 %v189, %v187
    %v242 = vpack.c.b16 %v190, %v188
    %v243 = vpack.c.b16 %v193, %v191
    %v244 = vpack.c.b16 %v194, %v192
    %v245 = vpack.c.b16 %v197, %v195
    %v246 = vpack.c.b16 %v198, %v196
    %v247 = vpack.c.b16 %v201, %v199
    %v248 = vpack.c.b16 %v202, %v200
    %v249 = vpack.c.b16 %v205, %v203
    %v250 = vpack.c.b16 %v206, %v204
    %v251 = vpack.c.b16 %v209, %v207
    %v252 = vpack.c.b16 %v210, %v208
    %v253 = vpack.c.b16 %v213, %v211
    %v254 = vpack.c.b16 %v214, %v212
    %v255 = vpack.c.b16 %v217, %v215
    %v256 = vpack.c.b16 %v218, %v216
    %v257 = vpack.c.b16 %v221, %v219
    %v258 = vpack.c.b16 %v222, %v220
    %v259 = vpack.c.b16 %v225, %v223
    %v260 = vpack.c.b16 %v226, %v224
    %v261 = vpack.c.b16 %v229, %v227
    %v262 = vpack.c.b16 %v230, %v228
    %v327 = vunpack.c.l.b16 %v91
    %v328 = vunpack.c.h.b16 %v91
    %v329 = vunpack.c.l.b16 %v92
    %v330 = vunpack.c.h.b16 %v92
    %v331 = vunpack.c.l.b16 %v93
    %v332 = vunpack.c.h.b16 %v93
    %v333 = vunpack.c.l.b16 %v94
    %v334 = vunpack.c.h.b16 %v94
    %v335 = vunpack.c.l.b16 %v95
    %v336 = vunpack.c.h.b16 %v95
    %v337 = vunpack.c.l.b16 %v96
    %v338 = vunpack.c.h.b16 %v96
    %v339 = vunpack.c.l.b16 %v97
    %v340 = vunpack.c.h.b16 %v97
    %v341 = vunpack.c.l.b16 %v98
    %v342 = vunpack.c.h.b16 %v98
    %v343 = vunpack.c.l.b16 %v99
    %v344 = vunpack.c.h.b16 %v99
    %v345 = vunpack.c.l.b16 %v100
    %v346 = vunpack.c.h.b16 %v100
    %v347 = vunpack.c.l.b16 %v101
    %v348 = vunpack.c.h.b16 %v101
    %v349 = vunpack.c.l.b16 %v102
    %v350 = vunpack.c.h.b16 %v102
    %v351 = vunpack.c.l.b16 %v103
    %v352 = vunpack.c.h.b16 %v103
    %v353 = vunpack.c.l.b16 %v104
    %v354 = vunpack.c.h.b16 %v104
    %v355 = vunpack.c.l.b16 %v105
    %v356 = vunpack.c.h.b16 %v105
    %v357 = vunpack.c.l.b16 %v106
    %v358 = vunpack.c.h.b16 %v106
    %v359 = vunpack.c.l.b16 %v107
    %v360 = vunpack.c.h.b16 %v107
    %v361 = vunpack.c.l.b16 %v108
    %v362 = vunpack.c.h.b16 %v108
    %v363 = vunpack.c.l.b16 %v109
    %v364 = vunpack.c.h.b16 %v109
    %v365 = vunpack.c.l.b16 %v110
    %v366 = vunpack.c.h.b16 %v110
    %v367 = vunpack.c.l.b16 %v111
    %v368 = vunpack.c.h.b16 %v111
    %v369 = vunpack.c.l.b16 %v112
    %v370 = vunpack.c.h.b16 %v112
    %v371 = vunpack.c.l.b16 %v113
    %v372 = vunpack.c.h.b16 %v113
    %v373 = vunpack.c.l.b16 %v114
    %v374 = vunpack.c.h.b16 %v114
    %v375 = vunpack.c.l.b16 %v115
    %v376 = vunpack.c.h.b16 %v115
    %v377 = vunpack.c.l.b16 %v116
    %v378 = vunpack.c.h.b16 %v116
    %v379 = vunpack.c.l.b16 %v117
    %v380 = vunpack.c.h.b16 %v117
    %v381 = vunpack.c.l.b16 %v118
    %v382 = vunpack.c.h.b16 %v118
    %v383 = vunpack.c.l.b16 %v119
    %v384 = vunpack.c.h.b16 %v119
    %v385 = vunpack.c.l.b16 %v120
    %v386 = vunpack.c.h.b16 %v120
    %v387 = vunpack.c.l.b16 %v121
    %v388 = vunpack.c.h.b16 %v121
    %v389 = vunpack.c.l.b16 %v122
    %v390 = vunpack.c.h.b16 %v122
    %v391 = vpack.c.b16 %v329, %v327
    %v392 = vpack.c.b16 %v330, %v328
    %v393 = vpack.c.b16 %v333, %v331
    %v394 = vpack.c.b16 %v334, %v332
    %v395 = vpack.c.b16 %v337, %v335
    %v396 = vpack.c.b16 %v338, %v336
    %v397 = vpack.c.b16 %v341, %v339
    %v398 = vpack.c.b16 %v342, %v340
    %v399 = vpack.c.b16 %v345, %v343
    %v400 = vpack.c.b16 %v346, %v344
    %v401 = vpack.c.b16 %v349, %v347
    %v402 = vpack.c.b16 %v350, %v348
    %v403 = vpack.c.b16 %v353, %v351
    %v404 = vpack.c.b16 %v354, %v352
    %v405 = vpack.c.b16 %v357, %v355
    %v406 = vpack.c.b16 %v358, %v356
    %v407 = vpack.c.b16 %v361, %v359
    %v408 = vpack.c.b16 %v362, %v360
    %v409 = vpack.c.b16 %v365, %v363
    %v410 = vpack.c.b16 %v366, %v364
    %v411 = vpack.c.b16 %v369, %v367
    %v412 = vpack.c.b16 %v370, %v368
    %v413 = vpack.c.b16 %v373, %v371
    %v414 = vpack.c.b16 %v374, %v372
    %v415 = vpack.c.b16 %v377, %v375
    %v416 = vpack.c.b16 %v378, %v376
    %v417 = vpack.c.b16 %v381, %v379
    %v418 = vpack.c.b16 %v382, %v380
    %v419 = vpack.c.b16 %v385, %v383
    %v420 = vpack.c.b16 %v386, %v384
    %v421 = vpack.c.b16 %v389, %v387
    %v422 = vpack.c.b16 %v390, %v388
    %455 = vmatprep.subr.bf16.mxu0 %v392
    %456 = vmatpush1.bf16.msra.mxu0 %v391
    %457 = vmatprep.subr.bf16.mxu0 %v394
    %458 = vmatpush1.bf16.msra.mxu0 %v393
    %459 = vmatprep.subr.bf16.mxu0 %v396
    %460 = vmatpush1.bf16.msra.mxu0 %v395
    %461 = vmatprep.subr.bf16.mxu0 %v398
    %462 = vmatpush1.bf16.msra.mxu0 %v397
    %463 = vmatprep.subr.bf16.mxu0 %v400
    %464 = vmatpush1.bf16.msra.mxu0 %v399
    %465 = vmatprep.subr.bf16.mxu0 %v402
    %466 = vmatpush1.bf16.msra.mxu0 %v401
    %467 = vmatprep.subr.bf16.mxu0 %v404
    %468 = vmatpush1.bf16.msra.mxu0 %v403
    %469 = vmatprep.subr.bf16.mxu0 %v406
    %470 = vmatpush1.bf16.msra.mxu0 %v405
    %471 = vmatprep.subr.bf16.mxu0 %v408
    %472 = vmatpush1.bf16.msra.mxu0 %v407
    %473 = vmatprep.subr.bf16.mxu0 %v410
    %474 = vmatpush1.bf16.msra.mxu0 %v409
    %475 = vmatprep.subr.bf16.mxu0 %v412
    %476 = vmatpush1.bf16.msra.mxu0 %v411
    %477 = vmatprep.subr.bf16.mxu0 %v414
    %478 = vmatpush1.bf16.msra.mxu0 %v413
    %479 = vmatprep.subr.bf16.mxu0 %v416
    %480 = vmatpush1.bf16.msra.mxu0 %v415
    %481 = vmatprep.subr.bf16.mxu0 %v418
    %482 = vmatpush1.bf16.msra.mxu0 %v417
    %483 = vmatprep.subr.bf16.mxu0 %v420
    %484 = vmatpush1.bf16.msra.mxu0 %v419
    %485 = vmatprep.subr.bf16.mxu0 %v422
    %486 = vmatpush1.bf16.msra.mxu0 %v421
    %487 = vmatprep.mubr.bf16.mxu0 %v232
    %488 = vmatmul.mubr.bf16.gmra.mrb[0].mxu0 %v231
    %v489 = vpop.f32.mrb[0].mxu0
    %v490 = vadd.f32 %v128, %v489
    %v491 = vpop.f32.mrb[0].mxu0
    %v492 = vadd.f32 %v132, %v491
    %v493 = vpop.f32.mrb[0].mxu0
    %v494 = vadd.f32 %v128, %v493
    %v495 = vpop.f32.mrb[0].mxu0
    %v496 = vadd.f32 %v132, %v495
    %497 = vmatprep.mubr.bf16.mxu0 %v234
    %498 = vmatmul.mubr.bf16.gmra.mrb[0].mxu0 %v233
    %v499 = vpop.f32.mrb[0].mxu0
    %v500 = vadd.f32 %v128, %v499
    %v501 = vpop.f32.mrb[0].mxu0
    %v502 = vadd.f32 %v132, %v501
    %v503 = vpop.f32.mrb[0].mxu0
    %v504 = vadd.f32 %v128, %v503
    %v505 = vpop.f32.mrb[0].mxu0
    %v506 = vadd.f32 %v132, %v505
    %507 = vmatprep.mubr.bf16.mxu0 %v236
    %508 = vmatmul.mubr.bf16.gmra.mrb[0].mxu0 %v235
    %v509 = vpop.f32.mrb[0].mxu0
    %v510 = vadd.f32 %v128, %v509
    %v511 = vpop.f32.mrb[0].mxu0
    %v512 = vadd.f32 %v132, %v511
    %v513 = vpop.f32.mrb[0].mxu0
    %v514 = vadd.f32 %v128, %v513
    %v515 = vpop.f32.mrb[0].mxu0
    %v516 = vadd.f32 %v132, %v515
    %517 = vmatprep.mubr.bf16.mxu0 %v238
    %518 = vmatmul.mubr.bf16.gmra.mrb[0].mxu0 %v237
    %v519 = vpop.f32.mrb[0].mxu0
    %v520 = vadd.f32 %v128, %v519
    %v521 = vpop.f32.mrb[0].mxu0
    %v522 = vadd.f32 %v132, %v521
    %v523 = vpop.f32.mrb[0].mxu0
    %v524 = vadd.f32 %v128, %v523
    %v525 = vpop.f32.mrb[0].mxu0
    %v526 = vadd.f32 %v132, %v525
    %527 = vmatprep.mubr.bf16.mxu0 %v240
    %528 = vmatmul.mubr.bf16.gmra.mrb[0].mxu0 %v239
    %v529 = vpop.f32.mrb[0].mxu0
    %v530 = vadd.f32 %v128, %v529
    %v531 = vpop.f32.mrb[0].mxu0
    %v532 = vadd.f32 %v132, %v531
    %v533 = vpop.f32.mrb[0].mxu0
    %v534 = vadd.f32 %v128, %v533
    %v535 = vpop.f32.mrb[0].mxu0
    %v536 = vadd.f32 %v132, %v535
    %537 = vmatprep.mubr.bf16.mxu0 %v242
    %538 = vmatmul.mubr.bf16.gmra.mrb[0].mxu0 %v241
    %v539 = vpop.f32.mrb[0].mxu0
    %v540 = vadd.f32 %v128, %v539
    %v541 = vpop.f32.mrb[0].mxu0
    %v542 = vadd.f32 %v132, %v541
    %v543 = vpop.f32.mrb[0].mxu0
    %v544 = vadd.f32 %v128, %v543
    %v545 = vpop.f32.mrb[0].mxu0
    %v546 = vadd.f32 %v132, %v545
    %547 = vmatprep.mubr.bf16.mxu0 %v244
    %548 = vmatmul.mubr.bf16.gmra.mrb[0].mxu0 %v243
    %v549 = vpop.f32.mrb[0].mxu0
    %v550 = vadd.f32 %v128, %v549
    %v551 = vpop.f32.mrb[0].mxu0
    %v552 = vadd.f32 %v132, %v551
    %v553 = vpop.f32.mrb[0].mxu0
    %v554 = vadd.f32 %v128, %v553
    %v555 = vpop.f32.mrb[0].mxu0
    %v556 = vadd.f32 %v132, %v555
    %557 = vmatprep.mubr.bf16.mxu0 %v246
    %558 = vmatmul.mubr.bf16.gmra.mrb[0].mxu0 %v245
    %v559 = vpop.f32.mrb[0].mxu0
    %v560 = vadd.f32 %v128, %v559
    %v561 = vpop.f32.mrb[0].mxu0
    %v562 = vadd.f32 %v132, %v561
    %v563 = vpop.f32.mrb[0].mxu0
    %v564 = vadd.f32 %v128, %v563
    %v565 = vpop.f32.mrb[0].mxu0
    %v566 = vadd.f32 %v132, %v565
    %567 = vmatprep.mubr.bf16.mxu0 %v248
    %568 = vmatmul.mubr.bf16.gmra.mrb[0].mxu0 %v247
    %v569 = vpop.f32.mrb[0].mxu0
    %v570 = vadd.f32 %v128, %v569
    %v571 = vpop.f32.mrb[0].mxu0
    %v572 = vadd.f32 %v132, %v571
    %v573 = vpop.f32.mrb[0].mxu0
    %v574 = vadd.f32 %v128, %v573
    %v575 = vpop.f32.mrb[0].mxu0
    %v576 = vadd.f32 %v132, %v575
    %577 = vmatprep.mubr.bf16.mxu0 %v250
    %578 = vmatmul.mubr.bf16.gmra.mrb[0].mxu0 %v249
    %v579 = vpop.f32.mrb[0].mxu0
    %v580 = vadd.f32 %v128, %v579
    %v581 = vpop.f32.mrb[0].mxu0
    %v582 = vadd.f32 %v132, %v581
    %v583 = vpop.f32.mrb[0].mxu0
    %v584 = vadd.f32 %v128, %v583
    %v585 = vpop.f32.mrb[0].mxu0
    %v586 = vadd.f32 %v132, %v585
    %587 = vmatprep.mubr.bf16.mxu0 %v252
    %588 = vmatmul.mubr.bf16.gmra.mrb[0].mxu0 %v251
    %v589 = vpop.f32.mrb[0].mxu0
    %v590 = vadd.f32 %v128, %v589
    %v591 = vpop.f32.mrb[0].mxu0
    %v592 = vadd.f32 %v132, %v591
    %v593 = vpop.f32.mrb[0].mxu0
    %v594 = vadd.f32 %v128, %v593
    %v595 = vpop.f32.mrb[0].mxu0
    %v596 = vadd.f32 %v132, %v595
    %597 = vmatprep.mubr.bf16.mxu0 %v254
    %598 = vmatmul.mubr.bf16.gmra.mrb[0].mxu0 %v253
    %v599 = vpop.f32.mrb[0].mxu0
    %v600 = vadd.f32 %v128, %v599
    %v601 = vpop.f32.mrb[0].mxu0
    %v602 = vadd.f32 %v132, %v601
    %v603 = vpop.f32.mrb[0].mxu0
    %v604 = vadd.f32 %v128, %v603
    %v605 = vpop.f32.mrb[0].mxu0
    %v606 = vadd.f32 %v132, %v605
    %607 = vmatprep.mubr.bf16.mxu0 %v256
    %608 = vmatmul.mubr.bf16.gmra.mrb[0].mxu0 %v255
    %v609 = vpop.f32.mrb[0].mxu0
    %v610 = vadd.f32 %v128, %v609
    %v611 = vpop.f32.mrb[0].mxu0
    %v612 = vadd.f32 %v132, %v611
    %v613 = vpop.f32.mrb[0].mxu0
    %v614 = vadd.f32 %v128, %v613
    %v615 = vpop.f32.mrb[0].mxu0
    %v616 = vadd.f32 %v132, %v615
    %617 = vmatprep.mubr.bf16.mxu0 %v258
    %618 = vmatmul.mubr.bf16.gmra.mrb[0].mxu0 %v257
    %v619 = vpop.f32.mrb[0].mxu0
    %v620 = vadd.f32 %v128, %v619
    %v621 = vpop.f32.mrb[0].mxu0
    %v622 = vadd.f32 %v132, %v621
    %v623 = vpop.f32.mrb[0].mxu0
    %v624 = vadd.f32 %v128, %v623
    %v625 = vpop.f32.mrb[0].mxu0
    %v626 = vadd.f32 %v132, %v625
    %627 = vmatprep.mubr.bf16.mxu0 %v260
    %628 = vmatmul.mubr.bf16.gmra.mrb[0].mxu0 %v259
    %v629 = vpop.f32.mrb[0].mxu0
    %v630 = vadd.f32 %v128, %v629
    %v631 = vpop.f32.mrb[0].mxu0
    %v632 = vadd.f32 %v132, %v631
    %v633 = vpop.f32.mrb[0].mxu0
    %v634 = vadd.f32 %v128, %v633
    %v635 = vpop.f32.mrb[0].mxu0
    %v636 = vadd.f32 %v132, %v635
    %637 = vmatprep.mubr.bf16.mxu0 %v262
    %638 = vmatmul.mubr.bf16.gmra.mrb[0].mxu0 %v261
    %v639 = vpop.f32.mrb[0].mxu0
    %v640 = vadd.f32 %v128, %v639
    %v641 = vpop.f32.mrb[0].mxu0
    %v642 = vadd.f32 %v132, %v641
    %v643 = vpop.f32.mrb[0].mxu0
    %v644 = vadd.f32 %v128, %v643
    %v645 = vpop.f32.mrb[0].mxu0
    %v646 = vadd.f32 %v132, %v645
    %647 = vdwg.mxu0
    %v648 = vpack.c.bf16 %v494, %v490
    %v649 = vpack.c.bf16 %v496, %v492
    %v650 = vpack.c.bf16 %v504, %v500
    %v651 = vpack.c.bf16 %v506, %v502
    %v652 = vpack.c.bf16 %v514, %v510
    %v653 = vpack.c.bf16 %v516, %v512
    %v654 = vpack.c.bf16 %v524, %v520
    %v655 = vpack.c.bf16 %v526, %v522
    %v656 = vpack.c.bf16 %v534, %v530
    %v657 = vpack.c.bf16 %v536, %v532
    %v658 = vpack.c.bf16 %v544, %v540
    %v659 = vpack.c.bf16 %v546, %v542
    %v660 = vpack.c.bf16 %v554, %v550
    %v661 = vpack.c.bf16 %v556, %v552
    %v662 = vpack.c.bf16 %v564, %v560
    %v663 = vpack.c.bf16 %v566, %v562
    %v664 = vpack.c.bf16 %v574, %v570
    %v665 = vpack.c.bf16 %v576, %v572
    %v666 = vpack.c.bf16 %v584, %v580
    %v667 = vpack.c.bf16 %v586, %v582
    %v668 = vpack.c.bf16 %v594, %v590
    %v669 = vpack.c.bf16 %v596, %v592
    %v670 = vpack.c.bf16 %v604, %v600
    %v671 = vpack.c.bf16 %v606, %v602
    %v672 = vpack.c.bf16 %v614, %v610
    %v673 = vpack.c.bf16 %v616, %v612
    %v674 = vpack.c.bf16 %v624, %v620
    %v675 = vpack.c.bf16 %v626, %v622
    %v676 = vpack.c.bf16 %v634, %v630
    %v677 = vpack.c.bf16 %v636, %v632
    %v678 = vpack.c.bf16 %v644, %v640
    %v679 = vpack.c.bf16 %v646, %v642
    %v680 = vld [vmem:[#allocation5] sm:$0xff]
    %v681 = vld [vmem:[#allocation5 + $0x8] sm:$0xff]
    %v682 = vld [vmem:[#allocation5 + $0x10] sm:$0xff]
    %v683 = vld [vmem:[#allocation5 + $0x18] sm:$0xff]
    %v684 = vld [vmem:[#allocation5 + $0x20] sm:$0xff]
    %v685 = vld [vmem:[#allocation5 + $0x28] sm:$0xff]
    %v686 = vld [vmem:[#allocation5 + $0x30] sm:$0xff]
    %v687 = vld [vmem:[#allocation5 + $0x38] sm:$0xff]
    %v688 = vld [vmem:[#allocation5 + $0x40] sm:$0xff]
    %v689 = vld [vmem:[#allocation5 + $0x48] sm:$0xff]
    %v690 = vld [vmem:[#allocation5 + $0x50] sm:$0xff]
    %v691 = vld [vmem:[#allocation5 + $0x58] sm:$0xff]
    %v692 = vld [vmem:[#allocation5 + $0x60] sm:$0xff]
    %v693 = vld [vmem:[#allocation5 + $0x68] sm:$0xff]
    %v694 = vld [vmem:[#allocation5 + $0x70] sm:$0xff]
    %v695 = vld [vmem:[#allocation5 + $0x78] sm:$0xff]
    %v696 = vld [vmem:[#allocation5 + $0x80] sm:$0xff]
    %v697 = vld [vmem:[#allocation5 + $0x88] sm:$0xff]
    %v698 = vld [vmem:[#allocation5 + $0x90] sm:$0xff]
    %v699 = vld [vmem:[#allocation5 + $0x98] sm:$0xff]
    %v700 = vld [vmem:[#allocation5 + $0xa0] sm:$0xff]
    %v701 = vld [vmem:[#allocation5 + $0xa8] sm:$0xff]
    %v702 = vld [vmem:[#allocation5 + $0xb0] sm:$0xff]
    %v703 = vld [vmem:[#allocation5 + $0xb8] sm:$0xff]
    %v704 = vld [vmem:[#allocation5 + $0xc0] sm:$0xff]
    %v705 = vld [vmem:[#allocation5 + $0xc8] sm:$0xff]
    %v706 = vld [vmem:[#allocation5 + $0xd0] sm:$0xff]
    %v707 = vld [vmem:[#allocation5 + $0xd8] sm:$0xff]
    %v708 = vld [vmem:[#allocation5 + $0xe0] sm:$0xff]
    %v709 = vld [vmem:[#allocation5 + $0xe8] sm:$0xff]
    %v710 = vld [vmem:[#allocation5 + $0xf0] sm:$0xff]
    %v711 = vld [vmem:[#allocation5 + $0xf8] sm:$0xff]
    %v744 = vunpack.c.l.b16 %v680
    %v745 = vunpack.c.h.b16 %v680
    %v746 = vunpack.c.l.b16 %v681
    %v747 = vunpack.c.h.b16 %v681
    %v748 = vunpack.c.l.b16 %v682
    %v749 = vunpack.c.h.b16 %v682
    %v750 = vunpack.c.l.b16 %v683
    %v751 = vunpack.c.h.b16 %v683
    %v752 = vunpack.c.l.b16 %v684
    %v753 = vunpack.c.h.b16 %v684
    %v754 = vunpack.c.l.b16 %v685
    %v755 = vunpack.c.h.b16 %v685
    %v756 = vunpack.c.l.b16 %v686
    %v757 = vunpack.c.h.b16 %v686
    %v758 = vunpack.c.l.b16 %v687
    %v759 = vunpack.c.h.b16 %v687
    %v760 = vunpack.c.l.b16 %v688
    %v761 = vunpack.c.h.b16 %v688
    %v762 = vunpack.c.l.b16 %v689
    %v763 = vunpack.c.h.b16 %v689
    %v764 = vunpack.c.l.b16 %v690
    %v765 = vunpack.c.h.b16 %v690
    %v766 = vunpack.c.l.b16 %v691
    %v767 = vunpack.c.h.b16 %v691
    %v768 = vunpack.c.l.b16 %v692
    %v769 = vunpack.c.h.b16 %v692
    %v770 = vunpack.c.l.b16 %v693
    %v771 = vunpack.c.h.b16 %v693
    %v772 = vunpack.c.l.b16 %v694
    %v773 = vunpack.c.h.b16 %v694
    %v774 = vunpack.c.l.b16 %v695
    %v775 = vunpack.c.h.b16 %v695
    %v776 = vunpack.c.l.b16 %v696
    %v777 = vunpack.c.h.b16 %v696
    %v778 = vunpack.c.l.b16 %v697
    %v779 = vunpack.c.h.b16 %v697
    %v780 = vunpack.c.l.b16 %v698
    %v781 = vunpack.c.h.b16 %v698
    %v782 = vunpack.c.l.b16 %v699
    %v783 = vunpack.c.h.b16 %v699
    %v784 = vunpack.c.l.b16 %v700
    %v785 = vunpack.c.h.b16 %v700
    %v786 = vunpack.c.l.b16 %v701
    %v787 = vunpack.c.h.b16 %v701
    %v788 = vunpack.c.l.b16 %v702
    %v789 = vunpack.c.h.b16 %v702
    %v790 = vunpack.c.l.b16 %v703
    %v791 = vunpack.c.h.b16 %v703
    %v792 = vunpack.c.l.b16 %v704
    %v793 = vunpack.c.h.b16 %v704
    %v794 = vunpack.c.l.b16 %v705
    %v795 = vunpack.c.h.b16 %v705
    %v796 = vunpack.c.l.b16 %v706
    %v797 = vunpack.c.h.b16 %v706
    %v798 = vunpack.c.l.b16 %v707
    %v799 = vunpack.c.h.b16 %v707
    %v800 = vunpack.c.l.b16 %v708
    %v801 = vunpack.c.h.b16 %v708
    %v802 = vunpack.c.l.b16 %v709
    %v803 = vunpack.c.h.b16 %v709
    %v804 = vunpack.c.l.b16 %v710
    %v805 = vunpack.c.h.b16 %v710
    %v806 = vunpack.c.l.b16 %v711
    %v807 = vunpack.c.h.b16 %v711
    %v808 = vpack.c.b16 %v746, %v744
    %v809 = vpack.c.b16 %v747, %v745
    %v810 = vpack.c.b16 %v750, %v748
    %v811 = vpack.c.b16 %v751, %v749
    %v812 = vpack.c.b16 %v754, %v752
    %v813 = vpack.c.b16 %v755, %v753
    %v814 = vpack.c.b16 %v758, %v756
    %v815 = vpack.c.b16 %v759, %v757
    %v816 = vpack.c.b16 %v762, %v760
    %v817 = vpack.c.b16 %v763, %v761
    %v818 = vpack.c.b16 %v766, %v764
    %v819 = vpack.c.b16 %v767, %v765
    %v820 = vpack.c.b16 %v770, %v768
    %v821 = vpack.c.b16 %v771, %v769
    %v822 = vpack.c.b16 %v774, %v772
    %v823 = vpack.c.b16 %v775, %v773
    %v824 = vpack.c.b16 %v778, %v776
    %v825 = vpack.c.b16 %v779, %v777
    %v826 = vpack.c.b16 %v782, %v780
    %v827 = vpack.c.b16 %v783, %v781
    %v828 = vpack.c.b16 %v786, %v784
    %v829 = vpack.c.b16 %v787, %v785
    %v830 = vpack.c.b16 %v790, %v788
    %v831 = vpack.c.b16 %v791, %v789
    %v832 = vpack.c.b16 %v794, %v792
    %v833 = vpack.c.b16 %v795, %v793
    %v834 = vpack.c.b16 %v798, %v796
    %v835 = vpack.c.b16 %v799, %v797
    %v836 = vpack.c.b16 %v802, %v800
    %v837 = vpack.c.b16 %v803, %v801
    %v838 = vpack.c.b16 %v806, %v804
    %v839 = vpack.c.b16 %v807, %v805
    %872 = vmatprep.subr.bf16.mxu0 %v649
    %873 = vmatpush1.bf16.msra.mxu0 %v648
    %874 = vmatprep.subr.bf16.mxu0 %v651
    %875 = vmatpush1.bf16.msra.mxu0 %v650
    %876 = vmatprep.subr.bf16.mxu0 %v653
    %877 = vmatpush1.bf16.msra.mxu0 %v652
    %878 = vmatprep.subr.bf16.mxu0 %v655
    %879 = vmatpush1.bf16.msra.mxu0 %v654
    %880 = vmatprep.subr.bf16.mxu0 %v657
    %881 = vmatpush1.bf16.msra.mxu0 %v656
    %882 = vmatprep.subr.bf16.mxu0 %v659
    %883 = vmatpush1.bf16.msra.mxu0 %v658
    %884 = vmatprep.subr.bf16.mxu0 %v661
    %885 = vmatpush1.bf16.msra.mxu0 %v660
    %886 = vmatprep.subr.bf16.mxu0 %v663
    %887 = vmatpush1.bf16.msra.mxu0 %v662
    %888 = vmatprep.subr.bf16.mxu0 %v665
    %889 = vmatpush1.bf16.msra.mxu0 %v664
    %890 = vmatprep.subr.bf16.mxu0 %v667
    %891 = vmatpush1.bf16.msra.mxu0 %v666
    %892 = vmatprep.subr.bf16.mxu0 %v669
    %893 = vmatpush1.bf16.msra.mxu0 %v668
    %894 = vmatprep.subr.bf16.mxu0 %v671
    %895 = vmatpush1.bf16.msra.mxu0 %v670
    %896 = vmatprep.subr.bf16.mxu0 %v673
    %897 = vmatpush1.bf16.msra.mxu0 %v672
    %898 = vmatprep.subr.bf16.mxu0 %v675
    %899 = vmatpush1.bf16.msra.mxu0 %v674
    %900 = vmatprep.subr.bf16.mxu0 %v677
    %901 = vmatpush1.bf16.msra.mxu0 %v676
    %902 = vmatprep.subr.bf16.mxu0 %v679
    %903 = vmatpush1.bf16.msra.mxu0 %v678
    %904 = vmatprep.mubr.bf16.mxu0 %v809
    %905 = vmatmul.mubr.bf16.gmra.mrb[0].mxu0 %v808
    %v906 = vpop.f32.mrb[0].mxu0
    %v907 = vadd.f32 0.0, %v906
    %v908 = vpop.f32.mrb[0].mxu0
    %v909 = vadd.f32 0.0, %v908
    %v910 = vpop.f32.mrb[0].mxu0
    %v911 = vadd.f32 0.0, %v910
    %v912 = vpop.f32.mrb[0].mxu0
    %v913 = vadd.f32 0.0, %v912
    %914 = vmatprep.mubr.bf16.mxu0 %v811
    %915 = vmatmul.mubr.bf16.gmra.mrb[0].mxu0 %v810
    %v916 = vpop.f32.mrb[0].mxu0
    %v917 = vadd.f32 0.0, %v916
    %v918 = vpop.f32.mrb[0].mxu0
    %v919 = vadd.f32 0.0, %v918
    %v920 = vpop.f32.mrb[0].mxu0
    %v921 = vadd.f32 0.0, %v920
    %v922 = vpop.f32.mrb[0].mxu0
    %v923 = vadd.f32 0.0, %v922
    %924 = vmatprep.mubr.bf16.mxu0 %v813
    %925 = vmatmul.mubr.bf16.gmra.mrb[0].mxu0 %v812
    %v926 = vpop.f32.mrb[0].mxu0
    %v927 = vadd.f32 0.0, %v926
    %v928 = vpop.f32.mrb[0].mxu0
    %v929 = vadd.f32 0.0, %v928
    %v930 = vpop.f32.mrb[0].mxu0
    %v931 = vadd.f32 0.0, %v930
    %v932 = vpop.f32.mrb[0].mxu0
    %v933 = vadd.f32 0.0, %v932
    %934 = vmatprep.mubr.bf16.mxu0 %v815
    %935 = vmatmul.mubr.bf16.gmra.mrb[0].mxu0 %v814
    %v936 = vpop.f32.mrb[0].mxu0
    %v937 = vadd.f32 0.0, %v936
    %v938 = vpop.f32.mrb[0].mxu0
    %v939 = vadd.f32 0.0, %v938
    %v940 = vpop.f32.mrb[0].mxu0
    %v941 = vadd.f32 0.0, %v940
    %v942 = vpop.f32.mrb[0].mxu0
    %v943 = vadd.f32 0.0, %v942
    %944 = vmatprep.mubr.bf16.mxu0 %v817
    %945 = vmatmul.mubr.bf16.gmra.mrb[0].mxu0 %v816
    %v946 = vpop.f32.mrb[0].mxu0
    %v947 = vadd.f32 0.0, %v946
    %v948 = vpop.f32.mrb[0].mxu0
    %v949 = vadd.f32 0.0, %v948
    %v950 = vpop.f32.mrb[0].mxu0
    %v951 = vadd.f32 0.0, %v950
    %v952 = vpop.f32.mrb[0].mxu0
    %v953 = vadd.f32 0.0, %v952
    %954 = vmatprep.mubr.bf16.mxu0 %v819
    %955 = vmatmul.mubr.bf16.gmra.mrb[0].mxu0 %v818
    %v956 = vpop.f32.mrb[0].mxu0
    %v957 = vadd.f32 0.0, %v956
    %v958 = vpop.f32.mrb[0].mxu0
    %v959 = vadd.f32 0.0, %v958
    %v960 = vpop.f32.mrb[0].mxu0
    %v961 = vadd.f32 0.0, %v960
    %v962 = vpop.f32.mrb[0].mxu0
    %v963 = vadd.f32 0.0, %v962
    %964 = vmatprep.mubr.bf16.mxu0 %v821
    %965 = vmatmul.mubr.bf16.gmra.mrb[0].mxu0 %v820
    %v966 = vpop.f32.mrb[0].mxu0
    %v967 = vadd.f32 0.0, %v966
    %v968 = vpop.f32.mrb[0].mxu0
    %v969 = vadd.f32 0.0, %v968
    %v970 = vpop.f32.mrb[0].mxu0
    %v971 = vadd.f32 0.0, %v970
    %v972 = vpop.f32.mrb[0].mxu0
    %v973 = vadd.f32 0.0, %v972
    %974 = vmatprep.mubr.bf16.mxu0 %v823
    %975 = vmatmul.mubr.bf16.gmra.mrb[0].mxu0 %v822
    %v976 = vpop.f32.mrb[0].mxu0
    %v977 = vadd.f32 0.0, %v976
    %v978 = vpop.f32.mrb[0].mxu0
    %v979 = vadd.f32 0.0, %v978
    %v980 = vpop.f32.mrb[0].mxu0
    %v981 = vadd.f32 0.0, %v980
    %v982 = vpop.f32.mrb[0].mxu0
    %v983 = vadd.f32 0.0, %v982
    %984 = vmatprep.mubr.bf16.mxu0 %v825
    %985 = vmatmul.mubr.bf16.gmra.mrb[0].mxu0 %v824
    %v986 = vpop.f32.mrb[0].mxu0
    %v987 = vadd.f32 0.0, %v986
    %v988 = vpop.f32.mrb[0].mxu0
    %v989 = vadd.f32 0.0, %v988
    %v990 = vpop.f32.mrb[0].mxu0
    %v991 = vadd.f32 0.0, %v990
    %v992 = vpop.f32.mrb[0].mxu0
    %v993 = vadd.f32 0.0, %v992
    %994 = vmatprep.mubr.bf16.mxu0 %v827
    %995 = vmatmul.mubr.bf16.gmra.mrb[0].mxu0 %v826
    %v996 = vpop.f32.mrb[0].mxu0
    %v997 = vadd.f32 0.0, %v996
    %v998 = vpop.f32.mrb[0].mxu0
    %v999 = vadd.f32 0.0, %v998
    %v1000 = vpop.f32.mrb[0].mxu0
    %v1001 = vadd.f32 0.0, %v1000
    %v1002 = vpop.f32.mrb[0].mxu0
    %v1003 = vadd.f32 0.0, %v1002
    %1004 = vmatprep.mubr.bf16.mxu0 %v829
    %1005 = vmatmul.mubr.bf16.gmra.mrb[0].mxu0 %v828
    %v1006 = vpop.f32.mrb[0].mxu0
    %v1007 = vadd.f32 0.0, %v1006
    %v1008 = vpop.f32.mrb[0].mxu0
    %v1009 = vadd.f32 0.0, %v1008
    %v1010 = vpop.f32.mrb[0].mxu0
    %v1011 = vadd.f32 0.0, %v1010
    %v1012 = vpop.f32.mrb[0].mxu0
    %v1013 = vadd.f32 0.0, %v1012
    %1014 = vmatprep.mubr.bf16.mxu0 %v831
    %1015 = vmatmul.mubr.bf16.gmra.mrb[0].mxu0 %v830
    %v1016 = vpop.f32.mrb[0].mxu0
    %v1017 = vadd.f32 0.0, %v1016
    %v1018 = vpop.f32.mrb[0].mxu0
    %v1019 = vadd.f32 0.0, %v1018
    %v1020 = vpop.f32.mrb[0].mxu0
    %v1021 = vadd.f32 0.0, %v1020
    %v1022 = vpop.f32.mrb[0].mxu0
    %v1023 = vadd.f32 0.0, %v1022
    %1024 = vmatprep.mubr.bf16.mxu0 %v833
    %1025 = vmatmul.mubr.bf16.gmra.mrb[0].mxu0 %v832
    %v1026 = vpop.f32.mrb[0].mxu0
    %v1027 = vadd.f32 0.0, %v1026
    %v1028 = vpop.f32.mrb[0].mxu0
    %v1029 = vadd.f32 0.0, %v1028
    %v1030 = vpop.f32.mrb[0].mxu0
    %v1031 = vadd.f32 0.0, %v1030
    %v1032 = vpop.f32.mrb[0].mxu0
    %v1033 = vadd.f32 0.0, %v1032
    %1034 = vmatprep.mubr.bf16.mxu0 %v835
    %1035 = vmatmul.mubr.bf16.gmra.mrb[0].mxu0 %v834
    %v1036 = vpop.f32.mrb[0].mxu0
    %v1037 = vadd.f32 0.0, %v1036
    %v1038 = vpop.f32.mrb[0].mxu0
    %v1039 = vadd.f32 0.0, %v1038
    %v1040 = vpop.f32.mrb[0].mxu0
    %v1041 = vadd.f32 0.0, %v1040
    %v1042 = vpop.f32.mrb[0].mxu0
    %v1043 = vadd.f32 0.0, %v1042
    %1044 = vmatprep.mubr.bf16.mxu0 %v837
    %1045 = vmatmul.mubr.bf16.gmra.mrb[0].mxu0 %v836
    %v1046 = vpop.f32.mrb[0].mxu0
    %v1047 = vadd.f32 0.0, %v1046
    %v1048 = vpop.f32.mrb[0].mxu0
    %v1049 = vadd.f32 0.0, %v1048
    %v1050 = vpop.f32.mrb[0].mxu0
    %v1051 = vadd.f32 0.0, %v1050
    %v1052 = vpop.f32.mrb[0].mxu0
    %v1053 = vadd.f32 0.0, %v1052
    %1054 = vmatprep.mubr.bf16.mxu0 %v839
    %1055 = vmatmul.mubr.bf16.gmra.mrb[0].mxu0 %v838
    %v1056 = vpop.f32.mrb[0].mxu0
    %v1057 = vadd.f32 0.0, %v1056
    %v1058 = vpop.f32.mrb[0].mxu0
    %v1059 = vadd.f32 0.0, %v1058
    %v1060 = vpop.f32.mrb[0].mxu0
    %v1061 = vadd.f32 0.0, %v1060
    %v1062 = vpop.f32.mrb[0].mxu0
    %v1063 = vadd.f32 0.0, %v1062
    %1064 = vdwg.mxu0
    %v1065 = vmax.f32 %v907, 0.0
    %v1066 = vmax.f32 %v909, 0.0
    %v1067 = vmax.f32 %v911, 0.0
    %v1068 = vmax.f32 %v913, 0.0
    %v1069 = vmax.f32 %v917, 0.0
    %v1070 = vmax.f32 %v919, 0.0
    %v1071 = vmax.f32 %v921, 0.0
    %v1072 = vmax.f32 %v923, 0.0
    %v1073 = vmax.f32 %v927, 0.0
    %v1074 = vmax.f32 %v929, 0.0
    %v1075 = vmax.f32 %v931, 0.0
    %v1076 = vmax.f32 %v933, 0.0
    %v1077 = vmax.f32 %v937, 0.0
    %v1078 = vmax.f32 %v939, 0.0
    %v1079 = vmax.f32 %v941, 0.0
    %v1080 = vmax.f32 %v943, 0.0
    %v1081 = vmax.f32 %v947, 0.0
    %v1082 = vmax.f32 %v949, 0.0
    %v1083 = vmax.f32 %v951, 0.0
    %v1084 = vmax.f32 %v953, 0.0
    %v1085 = vmax.f32 %v957, 0.0
    %v1086 = vmax.f32 %v959, 0.0
    %v1087 = vmax.f32 %v961, 0.0
    %v1088 = vmax.f32 %v963, 0.0
    %v1089 = vmax.f32 %v967, 0.0
    %v1090 = vmax.f32 %v969, 0.0
    %v1091 = vmax.f32 %v971, 0.0
    %v1092 = vmax.f32 %v973, 0.0
    %v1093 = vmax.f32 %v977, 0.0
    %v1094 = vmax.f32 %v979, 0.0
    %v1095 = vmax.f32 %v981, 0.0
    %v1096 = vmax.f32 %v983, 0.0
    %v1097 = vmax.f32 %v987, 0.0
    %v1098 = vmax.f32 %v989, 0.0
    %v1099 = vmax.f32 %v991, 0.0
    %v1100 = vmax.f32 %v993, 0.0
    %v1101 = vmax.f32 %v997, 0.0
    %v1102 = vmax.f32 %v999, 0.0
    %v1103 = vmax.f32 %v1001, 0.0
    %v1104 = vmax.f32 %v1003, 0.0
    %v1105 = vmax.f32 %v1007, 0.0
    %v1106 = vmax.f32 %v1009, 0.0
    %v1107 = vmax.f32 %v1011, 0.0
    %v1108 = vmax.f32 %v1013, 0.0
    %v1109 = vmax.f32 %v1017, 0.0
    %v1110 = vmax.f32 %v1019, 0.0
    %v1111 = vmax.f32 %v1021, 0.0
    %v1112 = vmax.f32 %v1023, 0.0
    %v1113 = vmax.f32 %v1027, 0.0
    %v1114 = vmax.f32 %v1029, 0.0
    %v1115 = vmax.f32 %v1031, 0.0
    %v1116 = vmax.f32 %v1033, 0.0
    %v1117 = vmax.f32 %v1037, 0.0
    %v1118 = vmax.f32 %v1039, 0.0
    %v1119 = vmax.f32 %v1041, 0.0
    %v1120 = vmax.f32 %v1043, 0.0
    %v1121 = vmax.f32 %v1047, 0.0
    %v1122 = vmax.f32 %v1049, 0.0
    %v1123 = vmax.f32 %v1051, 0.0
    %v1124 = vmax.f32 %v1053, 0.0
    %v1125 = vmax.f32 %v1057, 0.0
    %v1126 = vmax.f32 %v1059, 0.0
    %v1127 = vmax.f32 %v1061, 0.0
    %v1128 = vmax.f32 %v1063, 0.0
    %1129 = vst [vmem:[#allocation8] sm:$0xff] %v1065
    %1130 = vst [vmem:[#allocation8 + $0x8] sm:$0xff] %v1066
    %1131 = vst [vmem:[#allocation8 + $0x10] sm:$0xff] %v1067
    %1132 = vst [vmem:[#allocation8 + $0x18] sm:$0xff] %v1068
    %1133 = vst [vmem:[#allocation8 + $0x20] sm:$0xff] %v1069
    %1134 = vst [vmem:[#allocation8 + $0x28] sm:$0xff] %v1070
    %1135 = vst [vmem:[#allocation8 + $0x30] sm:$0xff] %v1071
    %1136 = vst [vmem:[#allocation8 + $0x38] sm:$0xff] %v1072
    %1137 = vst [vmem:[#allocation8 + $0x40] sm:$0xff] %v1073
    %1138 = vst [vmem:[#allocation8 + $0x48] sm:$0xff] %v1074
    %1139 = vst [vmem:[#allocation8 + $0x50] sm:$0xff] %v1075
    %1140 = vst [vmem:[#allocation8 + $0x58] sm:$0xff] %v1076
    %1141 = vst [vmem:[#allocation8 + $0x60] sm:$0xff] %v1077
    %1142 = vst [vmem:[#allocation8 + $0x68] sm:$0xff] %v1078
    %1143 = vst [vmem:[#allocation8 + $0x70] sm:$0xff] %v1079
    %1144 = vst [vmem:[#allocation8 + $0x78] sm:$0xff] %v1080
    %1145 = vst [vmem:[#allocation8 + $0x80] sm:$0xff] %v1081
    %1146 = vst [vmem:[#allocation8 + $0x88] sm:$0xff] %v1082
    %1147 = vst [vmem:[#allocation8 + $0x90] sm:$0xff] %v1083
    %1148 = vst [vmem:[#allocation8 + $0x98] sm:$0xff] %v1084
    %1149 = vst [vmem:[#allocation8 + $0xa0] sm:$0xff] %v1085
    %1150 = vst [vmem:[#allocation8 + $0xa8] sm:$0xff] %v1086
    %1151 = vst [vmem:[#allocation8 + $0xb0] sm:$0xff] %v1087
    %1152 = vst [vmem:[#allocation8 + $0xb8] sm:$0xff] %v1088
    %1153 = vst [vmem:[#allocation8 + $0xc0] sm:$0xff] %v1089
    %1154 = vst [vmem:[#allocation8 + $0xc8] sm:$0xff] %v1090
    %1155 = vst [vmem:[#allocation8 + $0xd0] sm:$0xff] %v1091
    %1156 = vst [vmem:[#allocation8 + $0xd8] sm:$0xff] %v1092
    %1157 = vst [vmem:[#allocation8 + $0xe0] sm:$0xff] %v1093
    %1158 = vst [vmem:[#allocation8 + $0xe8] sm:$0xff] %v1094
    %1159 = vst [vmem:[#allocation8 + $0xf0] sm:$0xff] %v1095
    %1160 = vst [vmem:[#allocation8 + $0xf8] sm:$0xff] %v1096
    %1161 = vst [vmem:[#allocation8 + $0x100] sm:$0xff] %v1097
    %1162 = vst [vmem:[#allocation8 + $0x108] sm:$0xff] %v1098
    %1163 = vst [vmem:[#allocation8 + $0x110] sm:$0xff] %v1099
    %1164 = vst [vmem:[#allocation8 + $0x118] sm:$0xff] %v1100
    %1165 = vst [vmem:[#allocation8 + $0x120] sm:$0xff] %v1101
    %1166 = vst [vmem:[#allocation8 + $0x128] sm:$0xff] %v1102
    %1167 = vst [vmem:[#allocation8 + $0x130] sm:$0xff] %v1103
    %1168 = vst [vmem:[#allocation8 + $0x138] sm:$0xff] %v1104
    %1169 = vst [vmem:[#allocation8 + $0x140] sm:$0xff] %v1105
    %1170 = vst [vmem:[#allocation8 + $0x148] sm:$0xff] %v1106
    %1171 = vst [vmem:[#allocation8 + $0x150] sm:$0xff] %v1107
    %1172 = vst [vmem:[#allocation8 + $0x158] sm:$0xff] %v1108
    %1173 = vst [vmem:[#allocation8 + $0x160] sm:$0xff] %v1109
    %1174 = vst [vmem:[#allocation8 + $0x168] sm:$0xff] %v1110
    %1175 = vst [vmem:[#allocation8 + $0x170] sm:$0xff] %v1111
    %1176 = vst [vmem:[#allocation8 + $0x178] sm:$0xff] %v1112
    %1177 = vst [vmem:[#allocation8 + $0x180] sm:$0xff] %v1113
    %1178 = vst [vmem:[#allocation8 + $0x188] sm:$0xff] %v1114
    %1179 = vst [vmem:[#allocation8 + $0x190] sm:$0xff] %v1115
    %1180 = vst [vmem:[#allocation8 + $0x198] sm:$0xff] %v1116
    %1181 = vst [vmem:[#allocation8 + $0x1a0] sm:$0xff] %v1117
    %1182 = vst [vmem:[#allocation8 + $0x1a8] sm:$0xff] %v1118
    %1183 = vst [vmem:[#allocation8 + $0x1b0] sm:$0xff] %v1119
    %1184 = vst [vmem:[#allocation8 + $0x1b8] sm:$0xff] %v1120
    %1185 = vst [vmem:[#allocation8 + $0x1c0] sm:$0xff] %v1121
    %1186 = vst [vmem:[#allocation8 + $0x1c8] sm:$0xff] %v1122
    %1187 = vst [vmem:[#allocation8 + $0x1d0] sm:$0xff] %v1123
    %1188 = vst [vmem:[#allocation8 + $0x1d8] sm:$0xff] %v1124
    %1189 = vst [vmem:[#allocation8 + $0x1e0] sm:$0xff] %v1125
    %1190 = vst [vmem:[#allocation8 + $0x1e8] sm:$0xff] %v1126
    %1191 = vst [vmem:[#allocation8 + $0x1f0] sm:$0xff] %v1127
    %1192 = vst [vmem:[#allocation8 + $0x1f8] sm:$0xff] %v1128
    // Predicated region
    $region30: #{tpu_custom_call.1} parent=1 // pred_check
      _
    $region31: #{tpu_custom_call.1} parent=1 // pred_check_branch
      %1194 = sbr.rel (0) target = $region33
    $region32: #{tpu_custom_call.1} parent=1 // pred_region
      %s1196 = ssub.s32 8192, 8192
      %1197 = vsyncadd [#allocation4], %s1196
      %s1198 = sshll.u32 [#allocation8], 4
      %s1199 = int_to_ptr.vmem [resolvable:$true] %s1198
      %1204 = dma.vmem_to_hbm [thread:$0]  %s1199, 8192, %s4, [#allocation4], 256, 256, 16
    $region33: #{tpu_custom_call.1} parent=1 // pred_fallthru
      _
    // Predicated region
    $region34: #{tpu_custom_call.1} parent=1 // pred_check
      _
    $region35: #{tpu_custom_call.1} parent=1 // pred_check_branch
      %1206 = sbr.rel (0) target = $region37
    $region36: #{tpu_custom_call.1} parent=1 // pred_region
      %1207 = dma.done [#allocation4], 8192
    $region37: #{tpu_custom_call.1} parent=1 // pred_fallthru
      _
    %1208 = vsyncpa [#allocation3], 1
    %1209 = vsyncpa [#allocation6], 1
    %1210 = vsyncpa [#allocation4], 1

</llo_original>
